<compile_context>
chip_gen: v6e
topology: v6e:2x2x1
jax: 0.10.0
libtpu: 0.0.40
codegen_flags: <defaults>
</compile_context>

<pallas_src>
import math

import jax
import jax.numpy as jnp
from jax.experimental import pallas as pl
from jax.experimental.pallas import tpu as pltpu

EPS = 1e-5  # matches torch.sqrt(var + 1e-05)


def dbg_embed_kernel(x_ref, w_ref, o_ref):
    # x_ref : (Bt, F)           raw dBG (Levenshtein-distance) features, F on lanes
    # w_ref : (d_model, 3)      conv taps, grid-invariant (stays VMEM resident)
    # o_ref : (Bt, d_model, F)  conv output in NCL layout -> F lane-dense store
    z = x_ref[...]                                            # (Bt, F)
    n_feat = z.shape[1]

    # Per-row normalization over the feature axis (population variance,
    # exactly torch.var(..., unbiased=False)).  Lane reductions on the VPU/XLU.
    mean = jnp.mean(z, axis=1, keepdims=True)                 # (Bt, 1)
    var = jnp.mean(jnp.square(z - mean), axis=1, keepdims=True)
    zn = (z - mean) * jax.lax.rsqrt(var + EPS)                # (Bt, F)

    # Circular padding of the size-3 conv == circular shifts along features.
    # pltpu.roll with positive axis + positive shifts -> single XLU vrot each.
    zl = pltpu.roll(zn, shift=1, axis=1)                      # zn[f-1]
    zr = pltpu.roll(zn, shift=n_feat - 1, axis=1)             # zn[f+1]  (== shift -1)

    # Split the single tap block with zero-cost static slices.
    w = w_ref[...]                                            # (d_model, 3)
    w0 = w[:, 0:1][None, :, :]                                # (1, d_model, 1)
    w1 = w[:, 1:2][None, :, :]
    w2 = w[:, 2:3][None, :, :]

    # VPU broadcast-FMA "conv":  y[b, m, f] = w0[m]*zl[b,f] + w1[m]*zn[b,f] + w2[m]*zr[b,f]
    # Computed AND stored in NCL layout (F on lanes) -> unmasked full-lane vst.
    y = (zl[:, None, :] * w0
         + zn[:, None, :] * w1
         + zr[:, None, :] * w2)                               # (Bt, d_model, F)
    o_ref[...] = y.astype(o_ref.dtype)


def _pick_batch_tile(batch: int, n_feat: int, d_model: int,
                     vmem_budget_bytes: int, min_grid_steps: int = 1) -> int:
    """Rows per grid block: the largest Bt whose double-buffered blocks fit the
    VMEM budget.  On single-TC chips (v5e/v6e) prefer the fewest, largest
    blocks; on v7x pass min_grid_steps=2 so both TensorCores get work."""
    # Double-buffered f32 bytes per batch row: input (F) + output (d_model*F).
    bytes_per_row = 2 * 4 * n_feat * (1 + d_model)
    bt = max(1, int(vmem_budget_bytes // bytes_per_row))
    if min_grid_steps > 1:
        bt = min(bt, pl.cdiv(batch, min_grid_steps))
    if bt >= batch:
        return batch
    # Sub-full blocks: keep the (bt, F) input block's second-to-last dim a
    # multiple of 8 (block-shape divisibility + full f32 sublane utilization).
    return max(8, (bt // 8) * 8)


def dbg_embedding_forward(dbg_feats, conv_weight, *, permute_output=True,
                          out_dtype=jnp.float32,
                          vmem_budget_bytes=20 << 20,
                          vmem_limit_bytes=32 << 20,
                          min_grid_steps=1):
    """dbg_feats: (B, F, 1) float32; conv_weight: (d_model, 1, 3) float32.

    permute_output=True  -> returns (B, F, d_model), matching
      dBGEmbedding.forward in eval mode (include_corr=False, lin_layer=False;
      dropout is identity in eval).
    permute_output=False -> returns the kernel's lane-dense (B, d_model, F)
      output; fold the permute(0, 2, 1) into the downstream consumer instead
      (the kernel is HBM-store-bound, so keep the store lane-dense).
    """
    B, F, _ = dbg_feats.shape
    d_model = conv_weight.shape[0]

    # Input: pure reshape (drop the trailing singleton) -- no XLA transpose op.
    x = dbg_feats.reshape(B, F).astype(jnp.float32)           # (B, F)

    # Weight: one (d_model, 3) block; taps sliced in-kernel.
    w = conv_weight[:, 0, :].astype(jnp.float32)              # (d_model, 3)

    bt = _pick_batch_tile(B, F, d_model, vmem_budget_bytes, min_grid_steps)
    grid = (pl.cdiv(B, bt),)

    out_bytes = jnp.dtype(out_dtype).itemsize
    cost = pl.CostEstimate(
        flops=int(5 * B * F * d_model + 6 * B * F),
        transcendentals=int(B),
        bytes_accessed=int(4 * (B * F + 3 * d_model)
                           + out_bytes * B * F * d_model),
    )

    out_ncl = pl.pallas_call(
        dbg_embed_kernel,
        out_shape=jax.ShapeDtypeStruct((B, d_model, F), out_dtype),
        grid_spec=pl.GridSpec(
            grid=grid,
            in_specs=[
                pl.BlockSpec((bt, F), lambda i: (i, 0)),
                pl.BlockSpec((d_model, 3), lambda i: (0, 0)),  # grid-invariant
            ],
            out_specs=pl.BlockSpec((bt, d_model, F), lambda i: (i, 0, 0)),
        ),
        compiler_params=pltpu.CompilerParams(
            dimension_semantics=("parallel",),
            vmem_limit_bytes=int(vmem_limit_bytes),
        ),
        cost_estimate=cost,
    )(x, w)

    if not permute_output:
        return out_ncl                                        # (B, d_model, F)
    # nn.Dropout(p=0.1) in eval mode is identity; final permute(0,2,1) to match
    # the PyTorch module's output layout.  In production prefer
    # permute_output=False and fold this into the consumer.
    return jnp.transpose(out_ncl, (0, 2, 1))                  # (B, F, d_model)


def ref_forward(dbg_feats, conv_weight):
    """Plain-JAX reference for the same computation (correctness check)."""
    z = dbg_feats[..., 0]                                     # (B, F)
    mean = z.mean(axis=1, keepdims=True)
    var = ((z - mean) ** 2).mean(axis=1, keepdims=True)
    zn = (z - mean) / jnp.sqrt(var + EPS)
    zl = jnp.roll(zn, 1, axis=-1)
    zr = jnp.roll(zn, -1, axis=-1)
    w = conv_weight[:, 0, :]                                  # (d_model, 3)
    out = (zl[:, None, :] * w[None, :, 0:1]
           + zn[:, None, :] * w[None, :, 1:2]
           + zr[:, None, :] * w[None, :, 2:3])                # (B, d_model, F)
    return jnp.transpose(out, (0, 2, 1))                      # (B, F, d_model)


if __name__ == "__main__":
    B = 2          # batch
    F = 128        # number of dBG graph features (len(self.features))
    d_model = 32   # conv output channels
    c_in = 1       # conv in_channels (include_corr=False)

    key = jax.random.PRNGKey(0)
    k_feat, k_w = jax.random.split(key)

    # Synthetic stand-in for the Levenshtein-distance embeddings (nonneg ints).
    dbg_feats = jax.random.randint(k_feat, (B, F, 1), 0, 20).astype(jnp.float32)

    # Conv1d weight (d_model, c_in, 3), kaiming_normal_(mode='fan_in',
    # nonlinearity='leaky_relu'): std = gain / sqrt(fan_in), fan_in = c_in * 3.
    gain = math.sqrt(2.0 / (1.0 + 0.01 ** 2))
    std = gain / math.sqrt(c_in * 3)
    conv_weight = jax.random.normal(k_w, (d_model, c_in, 3), jnp.float32) * std

    # Module-semantics path (B, F, d_model).
    out = dbg_embedding_forward(dbg_feats, conv_weight)
    out = jax.block_until_ready(out)

    # Lane-dense production path (B, d_model, F); permute folded into consumer.
    out_ncl = dbg_embedding_forward(dbg_feats, conv_weight, permute_output=False)
    out_ncl = jax.block_until_ready(out_ncl)

    ref = ref_forward(dbg_feats, conv_weight)
    assert out.shape == (B, F, d_model), out.shape
    assert out_ncl.shape == (B, d_model, F), out_ncl.shape
    assert jnp.allclose(out, ref, atol=1e-4, rtol=1e-4), "mismatch vs reference"
    assert jnp.allclose(out_ncl, jnp.transpose(ref, (0, 2, 1)),
                        atol=1e-4, rtol=1e-4), "mismatch vs reference (NCL)"

    print("KERNEL_OK")
</pallas_src>

<mosaic_0001>
module attributes {stable_mosaic.version = 11 : i64} {
  func.func @dbg_embed_kernel(%arg0: i32, %arg1: memref<2x128xf32, #tpu.memory_space<vmem>>, %arg2: memref<32x3xf32, #tpu.memory_space<vmem>>, %arg3: memref<2x32x128xf32, #tpu.memory_space<vmem>>) attributes {dimension_semantics = [#tpu.dimension_semantics<parallel>], iteration_bounds = array<i64: 1>, scalar_prefetch = 0 : i64, scratch_operands = 0 : i64, tpu.core_type = #tpu.core_type<tc>, window_params = [{transform_indices = @transform_0, window_bounds = array<i64: 2, 128>}, {pipeline_mode = #tpu.pipeline_mode<synchronous>, transform_indices = @transform_1, window_bounds = array<i64: 32, 3>}, {transform_indices = @transform_2, window_bounds = array<i64: 2, 32, 128>}]} {
    %c0 = arith.constant 0 : index
    %c0_0 = arith.constant 0 : index
    %0 = vector.load %arg1[%c0, %c0_0] : memref<2x128xf32, #tpu.memory_space<vmem>>, vector<2x128xf32>
    %cst = arith.constant dense<0.000000e+00> : vector<2xf32>
    %1 = vector.multi_reduction <add>, %0, %cst [1] : vector<2x128xf32> to vector<2xf32>
    %2 = vector.shape_cast %1 : vector<2xf32> to vector<2x1xf32>
    %cst_1 = arith.constant 1.280000e+02 : f32
    %3 = vector.broadcast %cst_1 : f32 to vector<2x1xf32>
    %4 = arith.divf %2, %3 : vector<2x1xf32>
    %5 = vector.broadcast %4 : vector<2x1xf32> to vector<2x128xf32>
    %6 = arith.subf %0, %5 : vector<2x128xf32>
    %7 = arith.mulf %6, %6 : vector<2x128xf32>
    %cst_2 = arith.constant dense<0.000000e+00> : vector<2xf32>
    %8 = vector.multi_reduction <add>, %7, %cst_2 [1] : vector<2x128xf32> to vector<2xf32>
    %9 = vector.shape_cast %8 : vector<2xf32> to vector<2x1xf32>
    %cst_3 = arith.constant 1.280000e+02 : f32
    %10 = vector.broadcast %cst_3 : f32 to vector<2x1xf32>
    %11 = arith.divf %9, %10 : vector<2x1xf32>
    %12 = vector.broadcast %4 : vector<2x1xf32> to vector<2x128xf32>
    %13 = arith.subf %0, %12 : vector<2x128xf32>
    %cst_4 = arith.constant 9.99999974E-6 : f32
    %14 = vector.broadcast %cst_4 : f32 to vector<2x1xf32>
    %15 = arith.addf %11, %14 : vector<2x1xf32>
    %16 = math.rsqrt %15 : vector<2x1xf32>
    %17 = vector.broadcast %16 : vector<2x1xf32> to vector<2x128xf32>
    %18 = arith.mulf %13, %17 : vector<2x128xf32>
    %c1_i32 = arith.constant 1 : i32
    %19 = tpu.dynamic_rotate %18 by %c1_i32 dim 1 : vector<2x128xf32>, i32 -> vector<2x128xf32>
    %c127_i32 = arith.constant 127 : i32
    %20 = tpu.dynamic_rotate %18 by %c127_i32 dim 1 : vector<2x128xf32>, i32 -> vector<2x128xf32>
    %c0_5 = arith.constant 0 : index
    %c0_6 = arith.constant 0 : index
    %21 = vector.load %arg2[%c0_5, %c0_6] : memref<32x3xf32, #tpu.memory_space<vmem>>, vector<32x3xf32>
    %22 = vector.extract_strided_slice %21 {offsets = [0, 0], sizes = [32, 1], strides = [1, 1]} : vector<32x3xf32> to vector<32x1xf32>
    %23 = vector.shape_cast %22 : vector<32x1xf32> to vector<1x32x1xf32>
    %24 = vector.extract_strided_slice %21 {offsets = [0, 1], sizes = [32, 1], strides = [1, 1]} : vector<32x3xf32> to vector<32x1xf32>
    %25 = vector.shape_cast %24 : vector<32x1xf32> to vector<1x32x1xf32>
    %26 = vector.extract_strided_slice %21 {offsets = [0, 2], sizes = [32, 1], strides = [1, 1]} : vector<32x3xf32> to vector<32x1xf32>
    %27 = vector.shape_cast %26 : vector<32x1xf32> to vector<1x32x1xf32>
    %28 = vector.shape_cast %19 : vector<2x128xf32> to vector<2x1x128xf32>
    %29 = vector.broadcast %28 : vector<2x1x128xf32> to vector<2x32x128xf32>
    %30 = vector.broadcast %23 : vector<1x32x1xf32> to vector<2x32x128xf32>
    %31 = arith.mulf %29, %30 : vector<2x32x128xf32>
    %32 = vector.shape_cast %18 : vector<2x128xf32> to vector<2x1x128xf32>
    %33 = vector.broadcast %32 : vector<2x1x128xf32> to vector<2x32x128xf32>
    %34 = vector.broadcast %25 : vector<1x32x1xf32> to vector<2x32x128xf32>
    %35 = arith.mulf %33, %34 : vector<2x32x128xf32>
    %36 = arith.addf %31, %35 : vector<2x32x128xf32>
    %37 = vector.shape_cast %20 : vector<2x128xf32> to vector<2x1x128xf32>
    %38 = vector.broadcast %37 : vector<2x1x128xf32> to vector<2x32x128xf32>
    %39 = vector.broadcast %27 : vector<1x32x1xf32> to vector<2x32x128xf32>
    %40 = arith.mulf %38, %39 : vector<2x32x128xf32>
    %41 = arith.addf %36, %40 : vector<2x32x128xf32>
    %c0_7 = arith.constant 0 : index
    %c0_8 = arith.constant 0 : index
    %c0_9 = arith.constant 0 : index
    %42 = vector.load %arg3[%c0_7, %c0_8, %c0_9] : memref<2x32x128xf32, #tpu.memory_space<vmem>>, vector<2x32x128xf32>
    tpu.vector_store %arg3[%c0_7, %c0_8, %c0_9], %41 {strides = array<i32>} : memref<2x32x128xf32, #tpu.memory_space<vmem>>, vector<2x32x128xf32>,
    return
  }
  func.func @transform_0(%arg0: i32) -> (i32, i32) {
    %c0_i32 = arith.constant 0 : i32
    %c0_i32_0 = arith.constant 0 : i32
    return %arg0, %c0_i32 : i32, i32
  }
  func.func @transform_1(%arg0: i32) -> (i32, i32) {
    %c0_i32 = arith.constant 0 : i32
    %c0_i32_0 = arith.constant 0 : i32
    %c0_i32_1 = arith.constant 0 : i32
    return %c0_i32, %c0_i32_0 : i32, i32
  }
  func.func @transform_2(%arg0: i32) -> (i32, i32, i32) {
    %c0_i32 = arith.constant 0 : i32
    %c0_i32_0 = arith.constant 0 : i32
    %c0_i32_1 = arith.constant 0 : i32
    return %arg0, %c0_i32, %c0_i32_0 : i32, i32, i32
  }
}

</mosaic_0001>

<llo_original>
// kernel: tpu_custom_call.1
$region0: #{tpu_custom_call.1}
  #allocation0 [shape = 'u32[]', space=smem, size = 0x4, offset = 0x4, fixed_abs, tag = 'smem constant byte address 0x4 - core index']
  #allocation1 [shape = 'u32[144,128]{1,0:T(1,128)}', space=vmem, size = 0x12000, scoped, tag = 'internal scratch']
  %s0 = inlined_call_operand.vmem [shape: f32[2,128], index: 0, kind: input, shape index: {}]
  %s1 = inlined_call_operand.vmem [shape: f32[32,3], index: 1, kind: input, shape index: {}]
  %s2 = inlined_call_operand.hbm [shape: f32[2,32,128], index: 2, kind: output, shape index: {}]
  %s3 = sld [smem:[#allocation0]]
  $region18: #{tpu_custom_call.1} parent=0
    _
  %s5 = ssub.s32 1, %s3
  %s6 = scalar_select 0, %s5, %s3
  $region1: #{tpu_custom_call.1} parent=0
    #allocation2 [shape = 'u8[32768]{0}', space=vmem, size = 0x8000, scoped, tag = 'output window, operand 0, single buffered']
    #allocation3 [shape = 's32[1]{0}', space=sflag, size = 0x4, scoped, tag = 'scoped memory for tpu_custom_call.1']
    %7 = vsyncpa [#allocation3], 0
    // Predicated region
    $region2: #{tpu_custom_call.1} parent=1 // pred_check
      _
    $region3: #{tpu_custom_call.1} parent=1 // pred_check_branch
      %9 = sbr.rel (0) target = $region5
    $region4: #{tpu_custom_call.1} parent=1 // pred_region
      _
    $region5: #{tpu_custom_call.1} parent=1 // pred_fallthru
      _
    // Predicated region
    $region6: #{tpu_custom_call.1} parent=1 // pred_check
      _
    $region7: #{tpu_custom_call.1} parent=1 // pred_check_branch
      %11 = sbr.rel (0) target = $region9
    $region8: #{tpu_custom_call.1} parent=1 // pred_region
      _
    $region9: #{tpu_custom_call.1} parent=1 // pred_fallthru
      _
    %v12 = vld [vmem:[%s0] sm:$0x3]
    %vm13 = vcmask 1041408
    %v14 = vsel %vm13, %v12, 0.0
    %15 = vadd.xlane.f32.xlu0 %v14
    %v16 = vpop.xlane.xlu0 %15
    %v17 = vrcp.pop 128.0
    %v18 = vmul.f32 %v16, %v17
    %v19 = vsub.f32 %v12, %v18
    %v20 = vmul.f32 %v19, %v19
    %v21 = vsel %vm13, %v20, 0.0
    %22 = vadd.xlane.f32.xlu0 %v21
    %v23 = vpop.xlane.xlu0 %22
    %v24 = vmul.f32 %v23, %v17
    %v25 = vadd.f32 %v24, 1e-05
    %v26 = vrsqrt.pop %v25
    %v27 = vmul.f32 %v19, %v26
    %28 = vrot.lane.b32.xlu0 %v27, 1
    %v29 = vpop.permute.xlu0 %28
    %30 = vrot.lane.b32.xlu0 %v27, 127
    %v31 = vpop.permute.xlu0 %30
    %v32 = vld [vmem:[%s1] sm:$0xff]
    %v33 = vld [vmem:[%s1 + $0x8] sm:$0xff]
    %v34 = vld [vmem:[%s1 + $0x10] sm:$0xff]
    %v35 = vld [vmem:[%s1 + $0x18] sm:$0xff]
    %v38 = vunpack.c.l.s4 1966171168
    %v39 = vunpack.c.0.s8 %v38
    %v40 = vlaneseq
    %v41 = vshrl.u32 %v40, 7
    %v42 = vsub.s32 %v39, %v41
    %v43 = vrot.slane %v29, %v42
    %v44 = vcombine.high %v43, %v43
    %v46 = vunpack.c.l.s4 1966171168
    %v47 = vunpack.c.0.s8 %v46
    %v48 = vlaneseq
    %v49 = vshrl.u32 %v48, 7
    %v50 = vsub.s32 %v47, %v49
    %v51 = vrot.slane %v43, %v50
    %v53 = vunpack.c.l.s4 1966171168
    %v54 = vunpack.c.0.s8 %v53
    %v55 = vlaneseq
    %v56 = vshrl.u32 %v55, 7
    %v57 = vsub.s32 %v54, %v56
    %v58 = vrot.slane %v44, %v57
    %v59 = vlaneseq
    %v60 = vshrl.u32 %v59, 7
    %v61 = vsub.s32 0, %v60
    %v62 = vrot.slane %v51, %v61
    %v63 = vlaneseq
    %v64 = vshrl.u32 %v63, 7
    %v65 = vsub.s32 0, %v64
    %v66 = vrot.slane %v58, %v65
    %70 = vset.pattern.permute.xlu0 0
    %71 = vperm.xlu0 %70, %v32
    %v72 = vpop.permute.xlu0 %71
    %75 = vset.pattern.permute.xlu0 0
    %76 = vperm.xlu0 %75, %v33
    %v77 = vpop.permute.xlu0 %76
    %80 = vset.pattern.permute.xlu0 0
    %81 = vperm.xlu0 %80, %v34
    %v82 = vpop.permute.xlu0 %81
    %85 = vset.pattern.permute.xlu0 0
    %86 = vperm.xlu0 %85, %v35
    %v87 = vpop.permute.xlu0 %86
    %v89 = vmul.f32 %v62, %v72
    %v90 = vmul.f32 %v62, %v77
    %v91 = vmul.f32 %v62, %v82
    %v92 = vmul.f32 %v62, %v87
    %v93 = vmul.f32 %v66, %v72
    %v94 = vmul.f32 %v66, %v77
    %v95 = vmul.f32 %v66, %v82
    %v96 = vmul.f32 %v66, %v87
    %v99 = vunpack.c.l.s4 1966171168
    %v100 = vunpack.c.0.s8 %v99
    %v101 = vlaneseq
    %v102 = vshrl.u32 %v101, 7
    %v103 = vsub.s32 %v100, %v102
    %v104 = vrot.slane %v27, %v103
    %v105 = vcombine.high %v104, %v104
    %v107 = vunpack.c.l.s4 1966171168
    %v108 = vunpack.c.0.s8 %v107
    %v109 = vlaneseq
    %v110 = vshrl.u32 %v109, 7
    %v111 = vsub.s32 %v108, %v110
    %v112 = vrot.slane %v104, %v111
    %v114 = vunpack.c.l.s4 1966171168
    %v115 = vunpack.c.0.s8 %v114
    %v116 = vlaneseq
    %v117 = vshrl.u32 %v116, 7
    %v118 = vsub.s32 %v115, %v117
    %v119 = vrot.slane %v105, %v118
    %v120 = vlaneseq
    %v121 = vshrl.u32 %v120, 7
    %v122 = vsub.s32 0, %v121
    %v123 = vrot.slane %v112, %v122
    %v124 = vlaneseq
    %v125 = vshrl.u32 %v124, 7
    %v126 = vsub.s32 0, %v125
    %v127 = vrot.slane %v119, %v126
    %130 = vset.pattern.permute.xlu0 1
    %131 = vperm.xlu0 %130, %v32
    %v132 = vpop.permute.xlu0 %131
    %134 = vset.pattern.permute.xlu0 1
    %135 = vperm.xlu0 %134, %v33
    %v136 = vpop.permute.xlu0 %135
    %138 = vset.pattern.permute.xlu0 1
    %139 = vperm.xlu0 %138, %v34
    %v140 = vpop.permute.xlu0 %139
    %142 = vset.pattern.permute.xlu0 1
    %143 = vperm.xlu0 %142, %v35
    %v144 = vpop.permute.xlu0 %143
    %v146 = vmul.f32 %v123, %v132
    %v147 = vmul.f32 %v123, %v136
    %v148 = vmul.f32 %v123, %v140
    %v149 = vmul.f32 %v123, %v144
    %v150 = vmul.f32 %v127, %v132
    %v151 = vmul.f32 %v127, %v136
    %v152 = vmul.f32 %v127, %v140
    %v153 = vmul.f32 %v127, %v144
    %v154 = vadd.f32 %v89, %v146
    %v155 = vadd.f32 %v90, %v147
    %v156 = vadd.f32 %v91, %v148
    %v157 = vadd.f32 %v92, %v149
    %v158 = vadd.f32 %v93, %v150
    %v159 = vadd.f32 %v94, %v151
    %v160 = vadd.f32 %v95, %v152
    %v161 = vadd.f32 %v96, %v153
    %v164 = vunpack.c.l.s4 1966171168
    %v165 = vunpack.c.0.s8 %v164
    %v166 = vlaneseq
    %v167 = vshrl.u32 %v166, 7
    %v168 = vsub.s32 %v165, %v167
    %v169 = vrot.slane %v31, %v168
    %v170 = vcombine.high %v169, %v169
    %v172 = vunpack.c.l.s4 1966171168
    %v173 = vunpack.c.0.s8 %v172
    %v174 = vlaneseq
    %v175 = vshrl.u32 %v174, 7
    %v176 = vsub.s32 %v173, %v175
    %v177 = vrot.slane %v169, %v176
    %v179 = vunpack.c.l.s4 1966171168
    %v180 = vunpack.c.0.s8 %v179
    %v181 = vlaneseq
    %v182 = vshrl.u32 %v181, 7
    %v183 = vsub.s32 %v180, %v182
    %v184 = vrot.slane %v170, %v183
    %v185 = vlaneseq
    %v186 = vshrl.u32 %v185, 7
    %v187 = vsub.s32 0, %v186
    %v188 = vrot.slane %v177, %v187
    %v189 = vlaneseq
    %v190 = vshrl.u32 %v189, 7
    %v191 = vsub.s32 0, %v190
    %v192 = vrot.slane %v184, %v191
    %195 = vset.pattern.permute.xlu0 2
    %196 = vperm.xlu0 %195, %v32
    %v197 = vpop.permute.xlu0 %196
    %199 = vset.pattern.permute.xlu0 2
    %200 = vperm.xlu0 %199, %v33
    %v201 = vpop.permute.xlu0 %200
    %203 = vset.pattern.permute.xlu0 2
    %204 = vperm.xlu0 %203, %v34
    %v205 = vpop.permute.xlu0 %204
    %207 = vset.pattern.permute.xlu0 2
    %208 = vperm.xlu0 %207, %v35
    %v209 = vpop.permute.xlu0 %208
    %v211 = vmul.f32 %v188, %v197
    %v212 = vmul.f32 %v188, %v201
    %v213 = vmul.f32 %v188, %v205
    %v214 = vmul.f32 %v188, %v209
    %v215 = vmul.f32 %v192, %v197
    %v216 = vmul.f32 %v192, %v201
    %v217 = vmul.f32 %v192, %v205
    %v218 = vmul.f32 %v192, %v209
    %v219 = vadd.f32 %v154, %v211
    %v220 = vadd.f32 %v155, %v212
    %v221 = vadd.f32 %v156, %v213
    %v222 = vadd.f32 %v157, %v214
    %v223 = vadd.f32 %v158, %v215
    %v224 = vadd.f32 %v159, %v216
    %v225 = vadd.f32 %v160, %v217
    %v226 = vadd.f32 %v161, %v218
    %227 = vst [vmem:[#allocation2] sm:$0xff] %v219
    %228 = vst [vmem:[#allocation2 + $0x8] sm:$0xff] %v220
    %229 = vst [vmem:[#allocation2 + $0x10] sm:$0xff] %v221
    %230 = vst [vmem:[#allocation2 + $0x18] sm:$0xff] %v222
    %231 = vst [vmem:[#allocation2 + $0x20] sm:$0xff] %v223
    %232 = vst [vmem:[#allocation2 + $0x28] sm:$0xff] %v224
    %233 = vst [vmem:[#allocation2 + $0x30] sm:$0xff] %v225
    %234 = vst [vmem:[#allocation2 + $0x38] sm:$0xff] %v226
    // Predicated region
    $region10: #{tpu_custom_call.1} parent=1 // pred_check
      _
    $region11: #{tpu_custom_call.1} parent=1 // pred_check_branch
      %236 = sbr.rel (0) target = $region13
    $region12: #{tpu_custom_call.1} parent=1 // pred_region
      %s238 = ssub.s32 1024, 1024
      %239 = vsyncadd [#allocation3], %s238
      %s240 = sshll.u32 [#allocation2], 4
      %s241 = int_to_ptr.vmem [resolvable:$true] %s240
      %246 = dma.vmem_to_hbm [thread:$0]  %s241, 1024, %s2, [#allocation3], 128, 128, 8
    $region13: #{tpu_custom_call.1} parent=1 // pred_fallthru
      _
    // Predicated region
    $region14: #{tpu_custom_call.1} parent=1 // pred_check
      _
    $region15: #{tpu_custom_call.1} parent=1 // pred_check_branch
      %248 = sbr.rel (0) target = $region17
    $region16: #{tpu_custom_call.1} parent=1 // pred_region
      %249 = dma.done [#allocation3], 1024
    $region17: #{tpu_custom_call.1} parent=1 // pred_fallthru
      _
    %250 = vsyncpa [#allocation3], 1

</llo_original>
